<compile_context>
chip_gen: v7x
topology: tpu7x:2x2x1
jax: 0.10.0
libtpu: 0.0.40
codegen_flags: <defaults>
</compile_context>

<pallas_src>
import jax
import jax.numpy as jnp
import numpy as np
from jax.experimental import pallas as pl
from jax.experimental.pallas import tpu as pltpu


def _transition_down_kernel(x_ref, scale_ref, shift_ref, bmat_ref, bias_ref, o_ref):
    # x_ref:     (1, Cin, 2*TH, W)      VMEM input tile (NCHW; W in lanes)
    # scale_ref: (1, Cin*W)             VMEM, folded BN scale, repeated W per channel
    # shift_ref: (1, Cin*W)             VMEM, folded BN shift, repeated W per channel
    # bmat_ref:  (Cin*W, Cout*W)        VMEM, fused conv-weight x column-gather matrix
    # bias_ref:  (1, Cout*Wh)           VMEM, conv bias repeated Wh per channel
    # o_ref:     (1, Cout, TH, W//2)    VMEM output tile (NCHW)
    cin = x_ref.shape[1]
    cout = o_ref.shape[1]
    th = x_ref.shape[2] // 2
    wh = o_ref.shape[3]
    cwh = cout * wh

    # Channels-in-lanes view of the tile, then folded BN + ReLU as one lane-dense
    # VPU pass (Cin*W lanes instead of Cin separate W-lane planes).
    y_raw = jnp.concatenate([x_ref[0, ci] for ci in range(cin)], axis=-1)   # (2TH, Cin*W)
    y = jnp.maximum(y_raw * scale_ref[...] + shift_ref[...], 0.0)

    # Single MXU matmul per tile: 1x1-conv channel mix fused with the even/odd
    # column gather.  Output lanes: [all even cols | all odd cols], each half laid
    # out (co-major, out-col-minor).
    g = jnp.dot(y, bmat_ref[...], preferred_element_type=jnp.float32)       # (2TH, Cout*W)

    # MaxPool 2x2 stride 2:
    #   rows: fold adjacent sublane pairs; cols: max of the even/odd lane halves.
    gr = g.reshape(th, 2, g.shape[1]).max(axis=1)                           # (TH, Cout*W)
    z = jnp.maximum(gr[:, :cwh], gr[:, cwh:]) + bias_ref[...]               # (TH, Cout*Wh)

    # Dropout: identity in eval mode.

    # Scatter the (co, j) lanes back into the NCHW output block.
    for co in range(cout):
        o_ref[0, co] = z[:, co * wh:(co + 1) * wh].astype(o_ref.dtype)


def _pad(x, m):
    return -(-x // m) * m


def _vmem_estimate(th, cin, cout, w, itemsize):
    """Approximate per-step VMEM peak: double-buffered in/out/const tiles plus the
    live f32 intermediates (y, g, gr, z), all rounded up to (8, 128) tiling."""
    wh = w // 2

    def tile_bytes(rows, cols, isz):
        return max(_pad(rows, 8), 8) * max(_pad(cols, 128), 128) * isz

    in_tile = cin * tile_bytes(2 * th, w, itemsize)
    out_tile = cout * tile_bytes(th, wh, itemsize)
    b_mat = tile_bytes(cin * w, cout * w, 4)
    vecs = 3 * tile_bytes(1, max(cin * w, cout * wh), 4)
    interm = (tile_bytes(2 * th, cin * w, 4)       # y_raw / y
              + tile_bytes(2 * th, cout * w, 4)    # g
              + tile_bytes(th, cout * w, 4)        # gr
              + tile_bytes(th, cout * wh, 4))      # z
    return 2 * in_tile + 2 * out_tile + 2 * b_mat + 2 * vecs + interm


def _pick_row_tile(n, cin, cout, h, w, itemsize, budget_bytes=28 << 20):
    """Pick TH = output rows per grid step (2*TH input rows read per step).

    TH must divide H//2 and be a multiple of 8 (or equal H//2, which is exempt from
    the (8,128) rule).  The TOTAL estimated VMEM peak is kept under budget_bytes so
    the kernel stays safe on v7x (64 MiB VMEM) while still taking large tiles."""
    half = h // 2
    cands = sorted({t for t in range(8, half, 8) if half % t == 0} | {half})
    fitting = [t for t in cands
               if _vmem_estimate(t, cin, cout, w, itemsize) <= budget_bytes]
    if not fitting:
        fitting = [cands[0]]
    th = max(fitting)
    # Keep >= 2 parallel grid steps when the batch axis alone cannot feed both v7x
    # TensorCores / give the BlockSpec pipeline something to overlap.
    if n * (half // th) < 2:
        smaller = [t for t in fitting if half // t >= 2]
        if smaller:
            th = max(smaller)
    return th


def transition_down(x_nchw, params):
    """Forward pass of Transition_Down (eval mode). x_nchw: (N, Cin, H, W) NCHW."""
    gamma, beta, rmean, rvar, eps, conv_w, conv_b = (
        params["gamma"], params["beta"], params["running_mean"],
        params["running_var"], params["eps"], params["conv_w"], params["conv_b"],
    )
    # Fold BN into a per-channel affine (inference statistics).
    scale = gamma / jnp.sqrt(rvar + eps)          # (Cin,)
    shift = beta - rmean * scale                  # (Cin,)

    N, Cin, H, W = x_nchw.shape
    Cout = conv_w.shape[0]
    assert H % 2 == 0 and W % 2 == 0
    Wh = W // 2

    # torch Conv2d weight (Cout, Cin, 1, 1) -> (Cout, Cin)
    w_mat = conv_w.reshape(Cout, Cin)

    # Fused conv-weight x column-gather matrix:
    #   B[ci*W + w_in, p*Cout*Wh + co*Wh + j] = w_mat[co, ci] * [w_in == 2j + p]
    ind = np.zeros((W, 2, Wh), np.float32)
    cols = np.arange(W)
    ind[cols, cols % 2, cols // 2] = 1.0
    bmat = jnp.einsum("oc,wpj->cwpoj", w_mat, jnp.asarray(ind)).reshape(Cin * W, Cout * W)
    # TODO(synk): large-W path (roll-based column pooling + channels-in-lanes conv)
    # not implemented; guard against the O(W^2) matrix blowing up VMEM.
    assert 2 * Cin * W * Cout * W * 4 <= (40 << 20), "large-W path not implemented"

    # Per-lane broadcast vectors for the channels-in-lanes layouts.
    scale_lanes = jnp.repeat(scale, W).reshape(1, Cin * W)
    shift_lanes = jnp.repeat(shift, W).reshape(1, Cin * W)
    bias_lanes = jnp.repeat(conv_b, Wh).reshape(1, Cout * Wh)

    itemsize = jnp.dtype(x_nchw.dtype).itemsize
    TH = _pick_row_tile(N, Cin, Cout, H, W, itemsize)
    assert (H // 2) % TH == 0
    n_row_tiles = (H // 2) // TH

    est = _vmem_estimate(TH, Cin, Cout, W, itemsize)
    vmem_limit = int(min(48 << 20, max(32 << 20, 2 * est)))

    out = pl.pallas_call(
        _transition_down_kernel,
        out_shape=jax.ShapeDtypeStruct((N, Cout, H // 2, Wh), x_nchw.dtype),
        grid=(N, n_row_tiles),
        in_specs=[
            pl.BlockSpec((1, Cin, 2 * TH, W), lambda n, h: (n, 0, h, 0)),
            pl.BlockSpec((1, Cin * W), lambda n, h: (0, 0)),
            pl.BlockSpec((1, Cin * W), lambda n, h: (0, 0)),
            pl.BlockSpec((Cin * W, Cout * W), lambda n, h: (0, 0)),
            pl.BlockSpec((1, Cout * Wh), lambda n, h: (0, 0)),
        ],
        out_specs=pl.BlockSpec((1, Cout, TH, Wh), lambda n, h: (n, 0, h, 0)),
        compiler_params=pltpu.CompilerParams(
            dimension_semantics=("parallel", "parallel"),
            vmem_limit_bytes=vmem_limit),
    )(x_nchw, scale_lanes, shift_lanes, bmat, bias_lanes)
    return out


def _reference(x_nchw, params):
    """Pure-JAX reference mirroring the PyTorch forward (eval mode)."""
    gamma, beta, rmean, rvar, eps, conv_w, conv_b = (
        params["gamma"], params["beta"], params["running_mean"],
        params["running_var"], params["eps"], params["conv_w"], params["conv_b"],
    )
    scale = (gamma / jnp.sqrt(rvar + eps)).reshape(1, -1, 1, 1)
    shift = (beta - rmean * gamma / jnp.sqrt(rvar + eps)).reshape(1, -1, 1, 1)
    y = jnp.maximum(x_nchw * scale + shift, 0.0)
    z = jnp.einsum("nchw,oc->nohw", y, conv_w.reshape(conv_w.shape[0], -1))
    z = z + conv_b.reshape(1, -1, 1, 1)
    N, C, H, W = z.shape
    z = z.reshape(N, C, H // 2, 2, W // 2, 2).max(axis=(3, 5))
    return z


if __name__ == "__main__":
    key = jax.random.PRNGKey(0)
    k_x, k_w = jax.random.split(key)

    N, Cin, Cout, H, W = 2, 4, 8, 16, 16

    x = jax.random.normal(k_x, (N, Cin, H, W), dtype=jnp.float32)

    # Deterministic parameter init mirroring the module's _initialize_weights:
    #   Conv2d: kaiming_uniform (bound = sqrt(6 / fan_in)), bias = 0
    #   BatchNorm2d: gamma = 1, beta = 0 (fresh running stats: mean 0, var 1)
    fan_in = Cin * 1 * 1
    bound = np.sqrt(6.0 / fan_in)
    conv_w = jax.random.uniform(k_w, (Cout, Cin, 1, 1),
                                minval=-bound, maxval=bound, dtype=jnp.float32)
    params = {
        "gamma": jnp.ones((Cin,), jnp.float32),
        "beta": jnp.zeros((Cin,), jnp.float32),
        "running_mean": jnp.zeros((Cin,), jnp.float32),
        "running_var": jnp.ones((Cin,), jnp.float32),
        "eps": 1e-5,
        "conv_w": conv_w,
        "conv_b": jnp.zeros((Cout,), jnp.float32),
    }

    out = transition_down(x, params)
    out = jax.block_until_ready(out)

    ref = _reference(x, params)
    assert out.shape == (N, Cout, H // 2, W // 2), out.shape
    np.testing.assert_allclose(np.asarray(out), np.asarray(ref),
                               rtol=1e-5, atol=1e-5)
    print("KERNEL_OK")
</pallas_src>

<mosaic_0001>
module attributes {stable_mosaic.version = 11 : i64} {
  func.func @_transition_down_kernel(%arg0: i32, %arg1: i32, %arg2: memref<1x4x16x16xf32, #tpu.memory_space<vmem>>, %arg3: memref<1x64xf32, #tpu.memory_space<vmem>>, %arg4: memref<1x64xf32, #tpu.memory_space<vmem>>, %arg5: memref<64x128xf32, #tpu.memory_space<vmem>>, %arg6: memref<1x64xf32, #tpu.memory_space<vmem>>, %arg7: memref<1x8x8x8xf32, #tpu.memory_space<vmem>>) attributes {dimension_semantics = [#tpu.dimension_semantics<parallel>, #tpu.dimension_semantics<parallel>], iteration_bounds = array<i64: 2, 1>, scalar_prefetch = 0 : i64, scratch_operands = 0 : i64, tpu.core_type = #tpu.core_type<tc>, window_params = [{transform_indices = @transform_0, window_bounds = array<i64: 1, 4, 16, 16>}, {pipeline_mode = #tpu.pipeline_mode<synchronous>, transform_indices = @transform_1, window_bounds = array<i64: 1, 64>}, {pipeline_mode = #tpu.pipeline_mode<synchronous>, transform_indices = @transform_2, window_bounds = array<i64: 1, 64>}, {pipeline_mode = #tpu.pipeline_mode<synchronous>, transform_indices = @transform_3, window_bounds = array<i64: 64, 128>}, {pipeline_mode = #tpu.pipeline_mode<synchronous>, transform_indices = @transform_4, window_bounds = array<i64: 1, 64>}, {transform_indices = @transform_5, window_bounds = array<i64: 1, 8, 8, 8>}]} {
    %c0 = arith.constant 0 : index
    %c0_0 = arith.constant 0 : index
    %c0_1 = arith.constant 0 : index
    %c0_2 = arith.constant 0 : index
    %0 = vector.load %arg2[%c0, %c0_0, %c0_1, %c0_2] : memref<1x4x16x16xf32, #tpu.memory_space<vmem>>, vector<1x1x16x16xf32>
    %1 = vector.shape_cast %0 : vector<1x1x16x16xf32> to vector<16x16xf32>
    %c0_3 = arith.constant 0 : index
    %c1 = arith.constant 1 : index
    %c0_4 = arith.constant 0 : index
    %c0_5 = arith.constant 0 : index
    %2 = vector.load %arg2[%c0_3, %c1, %c0_4, %c0_5] : memref<1x4x16x16xf32, #tpu.memory_space<vmem>>, vector<1x1x16x16xf32>
    %3 = vector.shape_cast %2 : vector<1x1x16x16xf32> to vector<16x16xf32>
    %c0_6 = arith.constant 0 : index
    %c2 = arith.constant 2 : index
    %c0_7 = arith.constant 0 : index
    %c0_8 = arith.constant 0 : index
    %4 = vector.load %arg2[%c0_6, %c2, %c0_7, %c0_8] : memref<1x4x16x16xf32, #tpu.memory_space<vmem>>, vector<1x1x16x16xf32>
    %5 = vector.shape_cast %4 : vector<1x1x16x16xf32> to vector<16x16xf32>
    %c0_9 = arith.constant 0 : index
    %c3 = arith.constant 3 : index
    %c0_10 = arith.constant 0 : index
    %c0_11 = arith.constant 0 : index
    %6 = vector.load %arg2[%c0_9, %c3, %c0_10, %c0_11] : memref<1x4x16x16xf32, #tpu.memory_space<vmem>>, vector<1x1x16x16xf32>
    %7 = vector.shape_cast %6 : vector<1x1x16x16xf32> to vector<16x16xf32>
    %8 = tpu.concatenate %1, %3, %5, %7 in 1 : vector<16x16xf32>, vector<16x16xf32>, vector<16x16xf32>, vector<16x16xf32> -> vector<16x64xf32>
    %c0_12 = arith.constant 0 : index
    %c0_13 = arith.constant 0 : index
    %9 = vector.load %arg3[%c0_12, %c0_13] : memref<1x64xf32, #tpu.memory_space<vmem>>, vector<1x64xf32>
    %10 = vector.broadcast %9 : vector<1x64xf32> to vector<16x64xf32>
    %11 = arith.mulf %8, %10 : vector<16x64xf32>
    %c0_14 = arith.constant 0 : index
    %c0_15 = arith.constant 0 : index
    %12 = vector.load %arg4[%c0_14, %c0_15] : memref<1x64xf32, #tpu.memory_space<vmem>>, vector<1x64xf32>
    %13 = vector.broadcast %12 : vector<1x64xf32> to vector<16x64xf32>
    %14 = arith.addf %11, %13 : vector<16x64xf32>
    %cst = arith.constant 0.000000e+00 : f32
    %15 = vector.broadcast %cst : f32 to vector<16x64xf32>
    %16 = arith.maximumf %14, %15 : vector<16x64xf32>
    %c0_16 = arith.constant 0 : index
    %c0_17 = arith.constant 0 : index
    %17 = vector.load %arg5[%c0_16, %c0_17] : memref<64x128xf32, #tpu.memory_space<vmem>>, vector<64x128xf32>
    %cst_18 = arith.constant dense<0.000000e+00> : vector<16x128xf32>
    %18 = tpu.matmul %16, %17, %cst_18 {dimension_numbers = #tpu.dot_dimension_numbers<[1], [0], [0], [1], [0, 0, 1, 1], [], []>} : vector<16x64xf32>, vector<64x128xf32>, vector<16x128xf32> -> vector<16x128xf32>
    %19 = vector.shape_cast %18 : vector<16x128xf32> to vector<8x2x128xf32>
    %cst_19 = arith.constant dense<0xFF800000> : vector<8x128xf32>
    %20 = vector.multi_reduction <maximumf>, %19, %cst_19 [1] : vector<8x2x128xf32> to vector<8x128xf32>
    %21 = vector.extract_strided_slice %20 {offsets = [0, 0], sizes = [8, 64], strides = [1, 1]} : vector<8x128xf32> to vector<8x64xf32>
    %22 = vector.extract_strided_slice %20 {offsets = [0, 64], sizes = [8, 64], strides = [1, 1]} : vector<8x128xf32> to vector<8x64xf32>
    %23 = arith.maximumf %21, %22 : vector<8x64xf32>
    %c0_20 = arith.constant 0 : index
    %c0_21 = arith.constant 0 : index
    %24 = vector.load %arg6[%c0_20, %c0_21] : memref<1x64xf32, #tpu.memory_space<vmem>>, vector<1x64xf32>
    %25 = vector.broadcast %24 : vector<1x64xf32> to vector<8x64xf32>
    %26 = arith.addf %23, %25 : vector<8x64xf32>
    %27 = vector.extract_strided_slice %26 {offsets = [0, 0], sizes = [8, 8], strides = [1, 1]} : vector<8x64xf32> to vector<8x8xf32>
    %c0_22 = arith.constant 0 : index
    %c0_23 = arith.constant 0 : index
    %c0_24 = arith.constant 0 : index
    %c0_25 = arith.constant 0 : index
    %28 = vector.load %arg7[%c0_22, %c0_23, %c0_24, %c0_25] : memref<1x8x8x8xf32, #tpu.memory_space<vmem>>, vector<1x1x8x8xf32>
    %29 = vector.shape_cast %28 : vector<1x1x8x8xf32> to vector<8x8xf32>
    %30 = vector.shape_cast %27 : vector<8x8xf32> to vector<1x1x8x8xf32>
    tpu.vector_store %arg7[%c0_22, %c0_23, %c0_24, %c0_25], %30 {strides = array<i32>} : memref<1x8x8x8xf32, #tpu.memory_space<vmem>>, vector<1x1x8x8xf32>,
    %31 = vector.extract_strided_slice %26 {offsets = [0, 8], sizes = [8, 8], strides = [1, 1]} : vector<8x64xf32> to vector<8x8xf32>
    %c0_26 = arith.constant 0 : index
    %c1_27 = arith.constant 1 : index
    %c0_28 = arith.constant 0 : index
    %c0_29 = arith.constant 0 : index
    %32 = vector.load %arg7[%c0_26, %c1_27, %c0_28, %c0_29] : memref<1x8x8x8xf32, #tpu.memory_space<vmem>>, vector<1x1x8x8xf32>
    %33 = vector.shape_cast %32 : vector<1x1x8x8xf32> to vector<8x8xf32>
    %34 = vector.shape_cast %31 : vector<8x8xf32> to vector<1x1x8x8xf32>
    tpu.vector_store %arg7[%c0_26, %c1_27, %c0_28, %c0_29], %34 {strides = array<i32>} : memref<1x8x8x8xf32, #tpu.memory_space<vmem>>, vector<1x1x8x8xf32>,
    %35 = vector.extract_strided_slice %26 {offsets = [0, 16], sizes = [8, 8], strides = [1, 1]} : vector<8x64xf32> to vector<8x8xf32>
    %c0_30 = arith.constant 0 : index
    %c2_31 = arith.constant 2 : index
    %c0_32 = arith.constant 0 : index
    %c0_33 = arith.constant 0 : index
    %36 = vector.load %arg7[%c0_30, %c2_31, %c0_32, %c0_33] : memref<1x8x8x8xf32, #tpu.memory_space<vmem>>, vector<1x1x8x8xf32>
    %37 = vector.shape_cast %36 : vector<1x1x8x8xf32> to vector<8x8xf32>
    %38 = vector.shape_cast %35 : vector<8x8xf32> to vector<1x1x8x8xf32>
    tpu.vector_store %arg7[%c0_30, %c2_31, %c0_32, %c0_33], %38 {strides = array<i32>} : memref<1x8x8x8xf32, #tpu.memory_space<vmem>>, vector<1x1x8x8xf32>,
    %39 = vector.extract_strided_slice %26 {offsets = [0, 24], sizes = [8, 8], strides = [1, 1]} : vector<8x64xf32> to vector<8x8xf32>
    %c0_34 = arith.constant 0 : index
    %c3_35 = arith.constant 3 : index
    %c0_36 = arith.constant 0 : index
    %c0_37 = arith.constant 0 : index
    %40 = vector.load %arg7[%c0_34, %c3_35, %c0_36, %c0_37] : memref<1x8x8x8xf32, #tpu.memory_space<vmem>>, vector<1x1x8x8xf32>
    %41 = vector.shape_cast %40 : vector<1x1x8x8xf32> to vector<8x8xf32>
    %42 = vector.shape_cast %39 : vector<8x8xf32> to vector<1x1x8x8xf32>
    tpu.vector_store %arg7[%c0_34, %c3_35, %c0_36, %c0_37], %42 {strides = array<i32>} : memref<1x8x8x8xf32, #tpu.memory_space<vmem>>, vector<1x1x8x8xf32>,
    %43 = vector.extract_strided_slice %26 {offsets = [0, 32], sizes = [8, 8], strides = [1, 1]} : vector<8x64xf32> to vector<8x8xf32>
    %c0_38 = arith.constant 0 : index
    %c4 = arith.constant 4 : index
    %c0_39 = arith.constant 0 : index
    %c0_40 = arith.constant 0 : index
    %44 = vector.load %arg7[%c0_38, %c4, %c0_39, %c0_40] : memref<1x8x8x8xf32, #tpu.memory_space<vmem>>, vector<1x1x8x8xf32>
    %45 = vector.shape_cast %44 : vector<1x1x8x8xf32> to vector<8x8xf32>
    %46 = vector.shape_cast %43 : vector<8x8xf32> to vector<1x1x8x8xf32>
    tpu.vector_store %arg7[%c0_38, %c4, %c0_39, %c0_40], %46 {strides = array<i32>} : memref<1x8x8x8xf32, #tpu.memory_space<vmem>>, vector<1x1x8x8xf32>,
    %47 = vector.extract_strided_slice %26 {offsets = [0, 40], sizes = [8, 8], strides = [1, 1]} : vector<8x64xf32> to vector<8x8xf32>
    %c0_41 = arith.constant 0 : index
    %c5 = arith.constant 5 : index
    %c0_42 = arith.constant 0 : index
    %c0_43 = arith.constant 0 : index
    %48 = vector.load %arg7[%c0_41, %c5, %c0_42, %c0_43] : memref<1x8x8x8xf32, #tpu.memory_space<vmem>>, vector<1x1x8x8xf32>
    %49 = vector.shape_cast %48 : vector<1x1x8x8xf32> to vector<8x8xf32>
    %50 = vector.shape_cast %47 : vector<8x8xf32> to vector<1x1x8x8xf32>
    tpu.vector_store %arg7[%c0_41, %c5, %c0_42, %c0_43], %50 {strides = array<i32>} : memref<1x8x8x8xf32, #tpu.memory_space<vmem>>, vector<1x1x8x8xf32>,
    %51 = vector.extract_strided_slice %26 {offsets = [0, 48], sizes = [8, 8], strides = [1, 1]} : vector<8x64xf32> to vector<8x8xf32>
    %c0_44 = arith.constant 0 : index
    %c6 = arith.constant 6 : index
    %c0_45 = arith.constant 0 : index
    %c0_46 = arith.constant 0 : index
    %52 = vector.load %arg7[%c0_44, %c6, %c0_45, %c0_46] : memref<1x8x8x8xf32, #tpu.memory_space<vmem>>, vector<1x1x8x8xf32>
    %53 = vector.shape_cast %52 : vector<1x1x8x8xf32> to vector<8x8xf32>
    %54 = vector.shape_cast %51 : vector<8x8xf32> to vector<1x1x8x8xf32>
    tpu.vector_store %arg7[%c0_44, %c6, %c0_45, %c0_46], %54 {strides = array<i32>} : memref<1x8x8x8xf32, #tpu.memory_space<vmem>>, vector<1x1x8x8xf32>,
    %55 = vector.extract_strided_slice %26 {offsets = [0, 56], sizes = [8, 8], strides = [1, 1]} : vector<8x64xf32> to vector<8x8xf32>
    %c0_47 = arith.constant 0 : index
    %c7 = arith.constant 7 : index
    %c0_48 = arith.constant 0 : index
    %c0_49 = arith.constant 0 : index
    %56 = vector.load %arg7[%c0_47, %c7, %c0_48, %c0_49] : memref<1x8x8x8xf32, #tpu.memory_space<vmem>>, vector<1x1x8x8xf32>
    %57 = vector.shape_cast %56 : vector<1x1x8x8xf32> to vector<8x8xf32>
    %58 = vector.shape_cast %55 : vector<8x8xf32> to vector<1x1x8x8xf32>
    tpu.vector_store %arg7[%c0_47, %c7, %c0_48, %c0_49], %58 {strides = array<i32>} : memref<1x8x8x8xf32, #tpu.memory_space<vmem>>, vector<1x1x8x8xf32>,
    return
  }
  func.func @transform_0(%arg0: i32, %arg1: i32) -> (i32, i32, i32, i32) {
    %c0_i32 = arith.constant 0 : i32
    %c0_i32_0 = arith.constant 0 : i32
    %c0_i32_1 = arith.constant 0 : i32
    return %arg0, %c0_i32, %arg1, %c0_i32_0 : i32, i32, i32, i32
  }
  func.func @transform_1(%arg0: i32, %arg1: i32) -> (i32, i32) {
    %c0_i32 = arith.constant 0 : i32
    %c0_i32_0 = arith.constant 0 : i32
    %c0_i32_1 = arith.constant 0 : i32
    return %c0_i32, %c0_i32_0 : i32, i32
  }
  func.func @transform_2(%arg0: i32, %arg1: i32) -> (i32, i32) {
    %c0_i32 = arith.constant 0 : i32
    %c0_i32_0 = arith.constant 0 : i32
    %c0_i32_1 = arith.constant 0 : i32
    return %c0_i32, %c0_i32_0 : i32, i32
  }
  func.func @transform_3(%arg0: i32, %arg1: i32) -> (i32, i32) {
    %c0_i32 = arith.constant 0 : i32
    %c0_i32_0 = arith.constant 0 : i32
    %c0_i32_1 = arith.constant 0 : i32
    return %c0_i32, %c0_i32_0 : i32, i32
  }
  func.func @transform_4(%arg0: i32, %arg1: i32) -> (i32, i32) {
    %c0_i32 = arith.constant 0 : i32
    %c0_i32_0 = arith.constant 0 : i32
    %c0_i32_1 = arith.constant 0 : i32
    return %c0_i32, %c0_i32_0 : i32, i32
  }
  func.func @transform_5(%arg0: i32, %arg1: i32) -> (i32, i32, i32, i32) {
    %c0_i32 = arith.constant 0 : i32
    %c0_i32_0 = arith.constant 0 : i32
    %c0_i32_1 = arith.constant 0 : i32
    return %arg0, %c0_i32, %arg1, %c0_i32_0 : i32, i32, i32, i32
  }
}

</mosaic_0001>

<llo_original>
// kernel: tpu_custom_call.1
$region0: #{tpu_custom_call.1}
  #allocation0 [shape = 'u32[]', space=smem, size = 0x4, offset = 0x4, fixed_abs, tag = 'smem constant byte address 0x4 - core index']
  #allocation1 [shape = 'u32[144,128]{1,0:T(1,128)}', space=vmem, size = 0x12000, scoped, tag = 'internal scratch']
  %s0 = inlined_call_operand.hbm [shape: f32[2,4,16,16], index: 0, kind: input, shape index: {}]
  %s1 = inlined_call_operand.vmem [shape: f32[1,64], index: 1, kind: input, shape index: {}]
  %s2 = inlined_call_operand.vmem [shape: f32[1,64], index: 2, kind: input, shape index: {}]
  %s3 = inlined_call_operand.hbm [shape: f32[64,128], index: 3, kind: input, shape index: {}]
  %s4 = inlined_call_operand.vmem [shape: f32[1,64], index: 4, kind: input, shape index: {}]
  %s5 = inlined_call_operand.hbm [shape: f32[2,8,8,8], index: 5, kind: output, shape index: {}]
  %s6 = sld [smem:[#allocation0]]
  $region61: #{tpu_custom_call.1} parent=0
    _
  %s8 = ssub.s32 1, %s6
  %s9 = scalar_select 0, %s8, %s6
  $region1: #{tpu_custom_call.1} parent=0
    #allocation2 [shape = 'u8[65536]{0}', space=vmem, size = 0x10000, scoped, tag = 'input window, operand 0']
    #allocation3 [shape = 's32[2]{0}', space=sflag, size = 0x8, scoped, tag = 'scoped memory for tpu_custom_call.1']
    #allocation4 [shape = 's32[2]{0}', space=sflag, size = 0x8, scoped, tag = 'scoped memory for tpu_custom_call.1']
    #allocation5 [shape = 'u8[32768]{0}', space=vmem, size = 0x8000, scoped, tag = 'input window, operand 3, single buffered']
    #allocation6 [shape = 's32[1]{0}', space=sflag, size = 0x4, scoped, tag = 'scoped memory for tpu_custom_call.1']
    #allocation7 [shape = 'u8[65536]{0}', space=vmem, size = 0x10000, scoped, tag = 'output window, operand 0']
    %10 = vsyncpa [#allocation3], 0
    %s11 = scalar_lea.sflag [#allocation3], 1
    %12 = vsyncpa %s11, 0
    %13 = vsyncpa [#allocation6], 0
    %14 = vsyncpa [#allocation4], 0
    %s15 = scalar_lea.sflag [#allocation4], 1
    %16 = vsyncpa %s15, 0
    loop: start=0, step=1, limit=4
    $region2: #{tpu_custom_call.1} parent=1 // loop_pre_header
      _
    $region3: #{tpu_custom_call.1} parent=1 // loop_header
      %s18 = sphi 0, %s22
      %p19 = scmp.ge.s32.totalorder %s18, 4
      %s25 = sphi 0, %s37
      %s26 = sphi 0, %s33
      %s27 = sphi 0, %s25
      %s28 = sphi 0, %s26
      %s29 = sphi 0, %s27
      %s30 = sphi 0, %s28
      %s42 = sphi 0, %s44
      %s45 = sphi 0, %s42
      %s46 = sphi 0, %s45
      %s62 = sphi 0, %s46
      %s66 = sphi 0, %s66
      %s68 = sphi 0, %s66
      %s69 = sphi 0, %s68
      %s83 = sphi 0, %s69
      %s87 = sphi 0, %s87
      %s89 = sphi 0, %s87
      %s90 = sphi 0, %s89
      %s104 = sphi 0, %s90
      %s108 = sphi 0, %s108
      %s110 = sphi 0, %s108
      %s111 = sphi 0, %s110
      %s125 = sphi 0, %s111
      %s129 = sphi 0, %s129
      %s131 = sphi 0, %s129
      %s132 = sphi 0, %s131
      %s146 = sphi 0, %s132
      %s154 = sphi 0, %s156
      %s157 = sphi 0, %s154
      %s158 = sphi 0, %s157
      %s174 = sphi 0, %s158
    $region4: #{tpu_custom_call.1} parent=1 // loop_header_branch
      %21 = sbr.rel (%p19) target = $region8
    $region5: #{tpu_custom_call.1} parent=1 // loop_body
      %s23 = ssub.s32 %s18, 1
      %s24 = ssub.s32 %s18, 2
      %s31 = sadd.s32 1, %s26
      %p32 = scmp.ge.s32.totalorder %s31, 1
      %s33 = scalar_select %p32, 0, %s31
      %s34 = sadd.s32 1, %s25
      %s35 = scalar_select %p32, %s34, %s25
      %p36 = scmp.ge.s32.totalorder %s35, 2
      %s37 = scalar_select %p36, 0, %s35
      %s38 = ssub.s32 %s25, %s37
      %s39 = ssub.s32 %s26, %s33
      %s40 = sor.u32 %s38, %s39
      %p41 = scmp.eq.s32.totalorder %s40, 0
      %s43 = sadd.s32 %s42, 1
      %s44 = scalar_select %p41, %s42, %s43
      %p47 = pneg %p41
      %p48 = scmp.eq.s32.totalorder %s18, 1
      %p49 = por %p47, %p48
      %p50 = scmp.ne.s32.totalorder %s42, %s45
      %p51 = scmp.eq.s32.totalorder %s18, 0
      %p52 = por %p50, %p51
      %p53 = scmp.ne.s32.totalorder %s42, %s45
      %p54 = scmp.eq.s32.totalorder %s23, 1
      %p55 = por %p53, %p54
      %p56 = scmp.ne.s32.totalorder %s45, %s46
      %p57 = scmp.eq.s32.totalorder %s23, 0
      %p58 = por %p56, %p57
      %p59 = scmp.ne.s32.totalorder %s45, %s46
      %p60 = scmp.eq.s32.totalorder %s24, 1
      %p61 = por %p59, %p60
      %p63 = scmp.ne.s32.totalorder %s46, %s62
      %p64 = scmp.eq.s32.totalorder %s24, 0
      %p65 = por %p63, %p64
      %s67 = sadd.s32 %s66, 1
      %p70 = scmp.eq.s32.totalorder %s18, 1
      %p71 = scmp.ne.s32.totalorder %s66, %s68
      %p72 = scmp.eq.s32.totalorder %s18, 0
      %p73 = por %p71, %p72
      %p74 = scmp.ne.s32.totalorder %s66, %s68
      %p75 = scmp.eq.s32.totalorder %s23, 1
      %p76 = por %p74, %p75
      %p77 = scmp.ne.s32.totalorder %s68, %s69
      %p78 = scmp.eq.s32.totalorder %s23, 0
      %p79 = por %p77, %p78
      %p80 = scmp.ne.s32.totalorder %s68, %s69
      %p81 = scmp.eq.s32.totalorder %s24, 1
      %p82 = por %p80, %p81
      %p84 = scmp.ne.s32.totalorder %s69, %s83
      %p85 = scmp.eq.s32.totalorder %s24, 0
      %p86 = por %p84, %p85
      %s88 = sadd.s32 %s87, 1
      %p91 = scmp.eq.s32.totalorder %s18, 1
      %p92 = scmp.ne.s32.totalorder %s87, %s89
      %p93 = scmp.eq.s32.totalorder %s18, 0
      %p94 = por %p92, %p93
      %p95 = scmp.ne.s32.totalorder %s87, %s89
      %p96 = scmp.eq.s32.totalorder %s23, 1
      %p97 = por %p95, %p96
      %p98 = scmp.ne.s32.totalorder %s89, %s90
      %p99 = scmp.eq.s32.totalorder %s23, 0
      %p100 = por %p98, %p99
      %p101 = scmp.ne.s32.totalorder %s89, %s90
      %p102 = scmp.eq.s32.totalorder %s24, 1
      %p103 = por %p101, %p102
      %p105 = scmp.ne.s32.totalorder %s90, %s104
      %p106 = scmp.eq.s32.totalorder %s24, 0
      %p107 = por %p105, %p106
      %s109 = sadd.s32 %s108, 1
      %p112 = scmp.eq.s32.totalorder %s18, 1
      %p113 = scmp.ne.s32.totalorder %s108, %s110
      %p114 = scmp.eq.s32.totalorder %s18, 0
      %p115 = por %p113, %p114
      %p116 = scmp.ne.s32.totalorder %s108, %s110
      %p117 = scmp.eq.s32.totalorder %s23, 1
      %p118 = por %p116, %p117
      %p119 = scmp.ne.s32.totalorder %s110, %s111
      %p120 = scmp.eq.s32.totalorder %s23, 0
      %p121 = por %p119, %p120
      %p122 = scmp.ne.s32.totalorder %s110, %s111
      %p123 = scmp.eq.s32.totalorder %s24, 1
      %p124 = por %p122, %p123
      %p126 = scmp.ne.s32.totalorder %s111, %s125
      %p127 = scmp.eq.s32.totalorder %s24, 0
      %p128 = por %p126, %p127
      %s130 = sadd.s32 %s129, 1
      %p133 = scmp.eq.s32.totalorder %s18, 1
      %p134 = scmp.ne.s32.totalorder %s129, %s131
      %p135 = scmp.eq.s32.totalorder %s18, 0
      %p136 = por %p134, %p135
      %p137 = scmp.ne.s32.totalorder %s129, %s131
      %p138 = scmp.eq.s32.totalorder %s23, 1
      %p139 = por %p137, %p138
      %p140 = scmp.ne.s32.totalorder %s131, %s132
      %p141 = scmp.eq.s32.totalorder %s23, 0
      %p142 = por %p140, %p141
      %p143 = scmp.ne.s32.totalorder %s131, %s132
      %p144 = scmp.eq.s32.totalorder %s24, 1
      %p145 = por %p143, %p144
      %p147 = scmp.ne.s32.totalorder %s132, %s146
      %p148 = scmp.eq.s32.totalorder %s24, 0
      %p149 = por %p147, %p148
      %s150 = ssub.s32 %s25, %s37
      %s151 = ssub.s32 %s26, %s33
      %s152 = sor.u32 %s150, %s151
      %p153 = scmp.eq.s32.totalorder %s152, 0
      %s155 = sadd.s32 %s154, 1
      %s156 = scalar_select %p153, %s154, %s155
      %p159 = pneg %p153
      %p160 = scmp.eq.s32.totalorder %s18, 1
      %p161 = por %p159, %p160
      %p162 = scmp.ne.s32.totalorder %s154, %s157
      %p163 = scmp.eq.s32.totalorder %s18, 0
      %p164 = por %p162, %p163
      %p165 = scmp.ne.s32.totalorder %s154, %s157
      %p166 = scmp.eq.s32.totalorder %s23, 1
      %p167 = por %p165, %p166
      %p168 = scmp.ne.s32.totalorder %s157, %s158
      %p169 = scmp.eq.s32.totalorder %s23, 0
      %p170 = por %p168, %p169
      %p171 = scmp.ne.s32.totalorder %s157, %s158
      %p172 = scmp.eq.s32.totalorder %s24, 1
      %p173 = por %p171, %p172
      %p175 = scmp.ne.s32.totalorder %s158, %s174
      %p176 = scmp.eq.s32.totalorder %s24, 0
      %p177 = por %p175, %p176
      %p178 = scmp.le.s32.totalorder 1, %s18
      %p179 = scmp.lt.s32.totalorder %s18, 3
      %p180 = pnand %p178, %p179
      %p181 = pneg %p180
      // Predicated region
      $region9: #{tpu_custom_call.1} parent=5 // pred_check
        _
      $region10: #{tpu_custom_call.1} parent=5 // pred_check_branch
        %183 = sbr.rel (%p180) target = $region12
      $region11: #{tpu_custom_call.1} parent=5 // pred_region
        %s184 = ssub.s32 %s18, 1
        // Predicated region
        $region13: #{tpu_custom_call.1} parent=11 // pred_check
          %p185 = pneg %p79
        $region14: #{tpu_custom_call.1} parent=11 // pred_check_branch
          %187 = sbr.rel (%p185) target = $region16
        $region15: #{tpu_custom_call.1} parent=11 // pred_region
          _
        $region16: #{tpu_custom_call.1} parent=11 // pred_fallthru
          _
        // Predicated region
        $region17: #{tpu_custom_call.1} parent=11 // pred_check
          %p188 = pneg %p100
        $region18: #{tpu_custom_call.1} parent=11 // pred_check_branch
          %190 = sbr.rel (%p188) target = $region20
        $region19: #{tpu_custom_call.1} parent=11 // pred_region
          _
        $region20: #{tpu_custom_call.1} parent=11 // pred_fallthru
          _
        // Predicated region
        $region21: #{tpu_custom_call.1} parent=11 // pred_check
          %p191 = pneg %p121
        $region22: #{tpu_custom_call.1} parent=11 // pred_check_branch
          %193 = sbr.rel (%p191) target = $region24
        $region23: #{tpu_custom_call.1} parent=11 // pred_region
          %s195 = ssub.s32 1024, 1024
          %196 = vsyncadd [#allocation6], %s195
          %s197 = sshll.u32 [#allocation5], 4
          %s198 = int_to_ptr.vmem [resolvable:$true] %s197
          %203 = dma.hbm_to_vmem [thread:$0]  %s3, 1024, %s198, [#allocation6], 128, 128, 8
        $region24: #{tpu_custom_call.1} parent=11 // pred_fallthru
          _
        // Predicated region
        $region25: #{tpu_custom_call.1} parent=11 // pred_check
          %p204 = pneg %p142
        $region26: #{tpu_custom_call.1} parent=11 // pred_check_branch
          %206 = sbr.rel (%p204) target = $region28
        $region27: #{tpu_custom_call.1} parent=11 // pred_region
          _
        $region28: #{tpu_custom_call.1} parent=11 // pred_fallthru
          _
      $region12: #{tpu_custom_call.1} parent=5 // pred_fallthru
        _
      %p207 = scmp.lt.s32.totalorder %s18, 2
      // Predicated region
      $region29: #{tpu_custom_call.1} parent=5 // pred_check
        %p208 = pneg %p207
      $region30: #{tpu_custom_call.1} parent=5 // pred_check_branch
        %210 = sbr.rel (%p208) target = $region32
      $region31: #{tpu_custom_call.1} parent=5 // pred_region
        // Predicated region
        $region33: #{tpu_custom_call.1} parent=31 // pred_check
          %p211 = pneg %p52
        $region34: #{tpu_custom_call.1} parent=31 // pred_check_branch
          %213 = sbr.rel (%p211) target = $region36
        $region35: #{tpu_custom_call.1} parent=31 // pred_region
          %s214 = sand.u32 %s42, 1
          %s215 = scalar_lea.sflag [#allocation3], %s214
          %s216 = sand.u32 %s42, 1
          %s217 = smul.addr %s216, 64
          %s218 = scalar_lea.vmem [#allocation2], %s217
          %s219 = smul.u32 2, %s26
          %s221 = ssub.s32 1024, 1024
          %222 = vsyncadd %s215, %s221
          %s223 = smul.addr %s25, 8
          %s224 = sadd.s32 %s219, %s223
          %s225 = smul.addr %s224, 128
          %s226 = scalar_lea.hbm %s0, %s225
          %s227 = sshll.u32 %s218, 4
          %s228 = int_to_ptr.vmem [resolvable:$true] %s227
          %233 = dma.hbm_to_vmem [thread:$0]  %s226, 1024, %s228, %s215, 128, 128, 8
        $region36: #{tpu_custom_call.1} parent=31 // pred_fallthru
          _
      $region32: #{tpu_custom_call.1} parent=5 // pred_fallthru
        _
      %p234 = scmp.le.s32.totalorder 1, %s18
      %p235 = scmp.lt.s32.totalorder %s18, 3
      %p236 = pnand %p234, %p235
      %p237 = pneg %p236
      // Predicated region
      $region37: #{tpu_custom_call.1} parent=5 // pred_check
        _
      $region38: #{tpu_custom_call.1} parent=5 // pred_check_branch
        %239 = sbr.rel (%p236) target = $region40
      $region39: #{tpu_custom_call.1} parent=5 // pred_region
        %s240 = ssub.s32 %s18, 1
        %s241 = sand.u32 %s45, 1
        %s242 = scalar_lea.sflag [#allocation3], %s241
        %s243 = sand.u32 %s45, 1
        %s244 = smul.addr %s243, 64
        %s245 = scalar_lea.vmem [#allocation2], %s244
        // Predicated region
        $region41: #{tpu_custom_call.1} parent=39 // pred_check
          %p246 = pneg %p58
        $region42: #{tpu_custom_call.1} parent=39 // pred_check_branch
          %248 = sbr.rel (%p246) target = $region44
        $region43: #{tpu_custom_call.1} parent=39 // pred_region
          %249 = dma.done %s242, 1024
        $region44: #{tpu_custom_call.1} parent=39 // pred_fallthru
          _
        // Predicated region
        $region45: #{tpu_custom_call.1} parent=39 // pred_check
          %p250 = pneg %p121
        $region46: #{tpu_custom_call.1} parent=39 // pred_check_branch
          %252 = sbr.rel (%p250) target = $region48
        $region47: #{tpu_custom_call.1} parent=39 // pred_region
          %253 = dma.done [#allocation6], 1024
        $region48: #{tpu_custom_call.1} parent=39 // pred_fallthru
          _
        %s254 = sand.u32 %s45, 1
        %s255 = scalar_lea.sflag [#allocation3], %s254
        %s256 = sand.u32 %s45, 1
        %s257 = smul.addr %s256, 64
        %s258 = scalar_lea.vmem [#allocation2], %s257
        %p259 = pneg %p58
        %p260 = pneg %p55
        %p261 = pneg %p79
        %p262 = pneg %p76
        %p263 = pneg %p100
        %p264 = pneg %p97
        %p265 = pneg %p121
        %p266 = pneg %p118
        %p267 = pneg %p142
        %p268 = pneg %p139
        %p269 = pneg %p170
        %p270 = pneg %p167
        %s271 = sand.u32 %s157, 1
        %s272 = scalar_lea.sflag [#allocation4], %s271
        %s273 = sand.u32 %s157, 1
        %s274 = smul.addr %s273, 64
        %s275 = scalar_lea.vmem [#allocation7], %s274
        %s276 = smul.u32 2, %s28
        %v277 = vld [vmem:[%s245] sm:$0xff]
        %v278 = vld [vmem:[%s245 + $0x8] sm:$0xff]
        %s279 = scalar_lea.vmem %s245, 16 [#allocation2]
        %v280 = vld [vmem:[%s279] sm:$0xff]
        %v281 = vld [vmem:[%s279 + $0x8] sm:$0xff]
        %s282 = scalar_lea.vmem %s245, 32 [#allocation2]
        %v283 = vld [vmem:[%s282] sm:$0xff]
        %v284 = vld [vmem:[%s282 + $0x8] sm:$0xff]
        %s285 = scalar_lea.vmem %s245, 48 [#allocation2]
        %v286 = vld [vmem:[%s285] sm:$0xff]
        %v287 = vld [vmem:[%s285 + $0x8] sm:$0xff]
        %290 = vrot.lane.b32.xlu0 %v280, 16
        %v291 = vpop.permute.xlu0 %290
        %292 = vrot.lane.b32.xlu0 %v281, 16
        %v293 = vpop.permute.xlu0 %292
        %298 = vrot.lane.b32.xlu0 %v283, 32
        %v299 = vpop.permute.xlu0 %298
        %300 = vrot.lane.b32.xlu0 %v284, 32
        %v301 = vpop.permute.xlu0 %300
        %306 = vrot.lane.b32.xlu0 %v286, 48
        %v307 = vpop.permute.xlu0 %306
        %308 = vrot.lane.b32.xlu0 %v287, 48
        %v309 = vpop.permute.xlu0 %308
        %vm312 = vcmask 130048
        %v313 = vsel %vm312, %v277, %v291
        %v314 = vsel %vm312, %v278, %v293
        %vm315 = vcmask 261120
        %v316 = vsel %vm315, %v313, %v299
        %v317 = vsel %vm315, %v314, %v301
        %vm318 = vcmask 392192
        %v319 = vsel %vm318, %v316, %v307
        %v320 = vsel %vm318, %v317, %v309
        %v321 = vld [vmem:[%s1] sm:$0x1]
        %v323 = vlaneseq
        %v324 = vshrl.u32 %v323, 7
        %v325 = vsub.s32 0, %v324
        %v326 = vrot.slane %v321, %v325
        %v328 = vmul.f32 %v319, %v326
        %v329 = vmul.f32 %v320, %v326
        %v330 = vld [vmem:[%s2] sm:$0x1]
        %v332 = vlaneseq
        %v333 = vshrl.u32 %v332, 7
        %v334 = vsub.s32 0, %v333
        %v335 = vrot.slane %v330, %v334
        %v337 = vadd.f32 %v328, %v335
        %v338 = vadd.f32 %v329, %v335
        %v339 = vmax.f32 %v337, 0.0
        %v340 = vmax.f32 %v338, 0.0
        %v341 = vld [vmem:[#allocation5] sm:$0xff]
        %v342 = vld [vmem:[#allocation5 + $0x8] sm:$0xff]
        %v343 = vld [vmem:[#allocation5 + $0x10] sm:$0xff]
        %v344 = vld [vmem:[#allocation5 + $0x18] sm:$0xff]
        %v345 = vld [vmem:[#allocation5 + $0x20] sm:$0xff]
        %v346 = vld [vmem:[#allocation5 + $0x28] sm:$0xff]
        %v347 = vld [vmem:[#allocation5 + $0x30] sm:$0xff]
        %v348 = vld [vmem:[#allocation5 + $0x38] sm:$0xff]
        %vm349 = vcmask 523264
        %v351 = vsel %vm349, %v339, 0
        %v354 = vsel %vm349, %v340, 0
        %356 = vmatprep.subr.mxu0 0.0
        %357 = vmatpush1.msra.mxu0 %v341
        %358 = vmatprep.subr.mxu0 0.0
        %359 = vmatpush1.msra.mxu0 %v342
        %360 = vmatprep.subr.mxu0 0.0
        %361 = vmatpush1.msra.mxu0 %v343
        %362 = vmatprep.subr.mxu0 0.0
        %363 = vmatpush1.msra.mxu0 %v344
        %364 = vmatprep.subr.mxu0 0.0
        %365 = vmatpush1.msra.mxu0 %v345
        %366 = vmatprep.subr.mxu0 0.0
        %367 = vmatpush1.msra.mxu0 %v346
        %368 = vmatprep.subr.mxu0 0.0
        %369 = vmatpush1.msra.mxu0 %v347
        %370 = vmatprep.subr.mxu0 0.0
        %371 = vmatpush1.msra.mxu0 %v348
        %372 = vmatprep.subr.mxu0 0.0
        %373 = vmatpush1.msra.mxu0 0.0
        %374 = vmatprep.subr.mxu0 0.0
        %375 = vmatpush1.msra.mxu0 0.0
        %376 = vmatprep.subr.mxu0 0.0
        %377 = vmatpush1.msra.mxu0 0.0
        %378 = vmatprep.subr.mxu0 0.0
        %379 = vmatpush1.msra.mxu0 0.0
        %380 = vmatprep.subr.mxu0 0.0
        %381 = vmatpush1.msra.mxu0 0.0
        %382 = vmatprep.subr.mxu0 0.0
        %383 = vmatpush1.msra.mxu0 0.0
        %384 = vmatprep.subr.mxu0 0.0
        %385 = vmatpush1.msra.mxu0 0.0
        %386 = vmatprep.subr.mxu0 0.0
        %387 = vmatpush1.msra.mxu0 0.0
        %388 = vmatprep.subr.mxu0 0.0
        %389 = vmatpush1.msra.mxu0 0.0
        %390 = vmatprep.subr.mxu0 0.0
        %391 = vmatpush1.msra.mxu0 0.0
        %392 = vmatprep.subr.mxu0 0.0
        %393 = vmatpush1.msra.mxu0 0.0
        %394 = vmatprep.subr.mxu0 0.0
        %395 = vmatpush1.msra.mxu0 0.0
        %396 = vmatprep.subr.mxu0 0.0
        %397 = vmatpush1.msra.mxu0 0.0
        %398 = vmatprep.subr.mxu0 0.0
        %399 = vmatpush1.msra.mxu0 0.0
        %400 = vmatprep.subr.mxu0 0.0
        %401 = vmatpush1.msra.mxu0 0.0
        %402 = vmatprep.subr.mxu0 0.0
        %403 = vmatpush1.msra.mxu0 0.0
        %404 = vmatprep.subr.mxu0 0.0
        %405 = vmatpush1.msra.mxu0 0.0
        %406 = vmatprep.subr.mxu0 0.0
        %407 = vmatpush1.msra.mxu0 0.0
        %408 = vmatprep.subr.mxu0 0.0
        %409 = vmatpush1.msra.mxu0 0.0
        %410 = vmatprep.subr.mxu0 0.0
        %411 = vmatpush1.msra.mxu0 0.0
        %412 = vmatprep.subr.mxu0 0.0
        %413 = vmatpush1.msra.mxu0 0.0
        %414 = vmatprep.subr.mxu0 0.0
        %415 = vmatpush1.msra.mxu0 0.0
        %416 = vmatprep.subr.mxu0 0.0
        %417 = vmatpush1.msra.mxu0 0.0
        %418 = vmatprep.subr.mxu0 0.0
        %419 = vmatpush1.msra.mxu0 0.0
        %420 = vmatprep.mubr.f32.mxu0 0.0
        %421 = vmatmul.mubr.f32.gmra.mrb[0].mxu0 %v351
        %v422 = vpop.f32.mrb[0].mxu0
        %v423 = vadd.f32 0.0, %v422
        %v424 = vpop.f32.mrb[0].mxu0
        %425 = vmatprep.mubr.f32.mxu0 0.0
        %426 = vmatmul.mubr.f32.gmra.mrb[0].mxu0 %v354
        %v427 = vpop.f32.mrb[0].mxu0
        %v428 = vadd.f32 0.0, %v427
        %v429 = vpop.f32.mrb[0].mxu0
        %430 = vdwg.mxu0
        %v433 = vcombine.high %v423, %v423
        %v435 = vunpack.c.l.s4 1983009808
        %v436 = vunpack.c.0.s8 %v435
        %v437 = vlaneseq
        %v438 = vshrl.u32 %v437, 7
        %v439 = vsub.s32 %v436, %v438
        %v440 = vrot.slane %v423, %v439
        %v442 = vunpack.c.l.s4 1983009808
        %v443 = vunpack.c.0.s8 %v442
        %v444 = vlaneseq
        %v445 = vshrl.u32 %v444, 7
        %v446 = vsub.s32 %v443, %v445
        %v447 = vrot.slane %v433, %v446
        %v448 = vcombine.high %v440, %v440
        %v449 = vcombine.high %v447, %v447
        %v450 = vcombine.high %v428, %v428
        %v452 = vunpack.c.l.s4 1983009808
        %v453 = vunpack.c.0.s8 %v452
        %v454 = vlaneseq
        %v455 = vshrl.u32 %v454, 7
        %v456 = vsub.s32 %v453, %v455
        %v457 = vrot.slane %v428, %v456
        %v459 = vunpack.c.l.s4 1983009808
        %v460 = vunpack.c.0.s8 %v459
        %v461 = vlaneseq
        %v462 = vshrl.u32 %v461, 7
        %v463 = vsub.s32 %v460, %v462
        %v464 = vrot.slane %v450, %v463
        %v465 = vcombine.high %v457, %v457
        %v466 = vcombine.high %v464, %v464
        %vm475 = vcmask 1041408
        %v476 = vsel %vm475, %v440, -inf
        %v477 = vrot.slane %v476, 4
        %v478 = vmax.f32 %v476, %v477
        %v479 = vrot.slane %v478, 2
        %v480 = vmax.f32 %v478, %v479
        %v481 = vrot.slane %v480, 1
        %v482 = vmax.f32 %v480, %v481
        %v483 = vsel %vm475, %v448, -inf
        %v484 = vrot.slane %v483, 4
        %v485 = vmax.f32 %v483, %v484
        %v486 = vrot.slane %v485, 2
        %v487 = vmax.f32 %v485, %v486
        %v488 = vrot.slane %v487, 1
        %v489 = vmax.f32 %v487, %v488
        %v490 = vsel %vm475, %v447, -inf
        %v491 = vrot.slane %v490, 4
        %v492 = vmax.f32 %v490, %v491
        %v493 = vrot.slane %v492, 2
        %v494 = vmax.f32 %v492, %v493
        %v495 = vrot.slane %v494, 1
        %v496 = vmax.f32 %v494, %v495
        %v497 = vsel %vm475, %v449, -inf
        %v498 = vrot.slane %v497, 4
        %v499 = vmax.f32 %v497, %v498
        %v500 = vrot.slane %v499, 2
        %v501 = vmax.f32 %v499, %v500
        %v502 = vrot.slane %v501, 1
        %v503 = vmax.f32 %v501, %v502
        %v504 = vsel %vm475, %v457, -inf
        %v505 = vrot.slane %v504, 4
        %v506 = vmax.f32 %v504, %v505
        %v507 = vrot.slane %v506, 2
        %v508 = vmax.f32 %v506, %v507
        %v509 = vrot.slane %v508, 1
        %v510 = vmax.f32 %v508, %v509
        %v511 = vsel %vm475, %v465, -inf
        %v512 = vrot.slane %v511, 4
        %v513 = vmax.f32 %v511, %v512
        %v514 = vrot.slane %v513, 2
        %v515 = vmax.f32 %v513, %v514
        %v516 = vrot.slane %v515, 1
        %v517 = vmax.f32 %v515, %v516
        %v518 = vsel %vm475, %v464, -inf
        %v519 = vrot.slane %v518, 4
        %v520 = vmax.f32 %v518, %v519
        %v521 = vrot.slane %v520, 2
        %v522 = vmax.f32 %v520, %v521
        %v523 = vrot.slane %v522, 1
        %v524 = vmax.f32 %v522, %v523
        %v525 = vsel %vm475, %v466, -inf
        %v526 = vrot.slane %v525, 4
        %v527 = vmax.f32 %v525, %v526
        %v528 = vrot.slane %v527, 2
        %v529 = vmax.f32 %v527, %v528
        %v530 = vrot.slane %v529, 1
        %v531 = vmax.f32 %v529, %v530
        %540 = vrot.lane.b32.xlu0 %v482, 64
        %v541 = vpop.permute.xlu0 %540
        %542 = vrot.lane.b32.xlu0 %v489, 64
        %v543 = vpop.permute.xlu0 %542
        %544 = vrot.lane.b32.xlu0 %v496, 64
        %v545 = vpop.permute.xlu0 %544
        %546 = vrot.lane.b32.xlu0 %v503, 64
        %v547 = vpop.permute.xlu0 %546
        %548 = vrot.lane.b32.xlu0 %v510, 64
        %v549 = vpop.permute.xlu0 %548
        %550 = vrot.lane.b32.xlu0 %v517, 64
        %v551 = vpop.permute.xlu0 %550
        %552 = vrot.lane.b32.xlu0 %v524, 64
        %v553 = vpop.permute.xlu0 %552
        %554 = vrot.lane.b32.xlu0 %v531, 64
        %v555 = vpop.permute.xlu0 %554
        %v564 = vmax.f32 %v482, %v541
        %v565 = vmax.f32 %v489, %v543
        %v566 = vmax.f32 %v496, %v545
        %v567 = vmax.f32 %v503, %v547
        %v568 = vmax.f32 %v510, %v549
        %v569 = vmax.f32 %v517, %v551
        %v570 = vmax.f32 %v524, %v553
        %v571 = vmax.f32 %v531, %v555
        %v572 = vld [vmem:[%s4] sm:$0x1]
        %v574 = vlaneseq
        %v575 = vshrl.u32 %v574, 7
        %v576 = vsub.s32 0, %v575
        %v577 = vrot.slane %v572, %v576
        %v579 = vadd.f32 %v564, %v577
        %v580 = vadd.f32 %v565, %v577
        %v581 = vadd.f32 %v566, %v577
        %v582 = vadd.f32 %v567, %v577
        %v583 = vadd.f32 %v568, %v577
        %v584 = vadd.f32 %v569, %v577
        %v585 = vadd.f32 %v570, %v577
        %v586 = vadd.f32 %v571, %v577
        %v595 = vrot.slane %v580, 7
        %vm596 = vcmask 1041409
        %v597 = vsel %vm596, %v595, %v579
        %v598 = vrot.slane %v581, 6
        %vm599 = vcmask 1042434
        %v600 = vsel %vm599, %v598, %v597
        %v601 = vrot.slane %v582, 5
        %vm602 = vcmask 1043459
        %v603 = vsel %vm602, %v601, %v600
        %v604 = vrot.slane %v583, 4
        %vm605 = vcmask 1044484
        %v606 = vsel %vm605, %v604, %v603
        %v607 = vrot.slane %v584, 3
        %vm608 = vcmask 1045509
        %v609 = vsel %vm608, %v607, %v606
        %v610 = vrot.slane %v585, 2
        %vm611 = vcmask 1046534
        %v612 = vsel %vm611, %v610, %v609
        %v613 = vrot.slane %v586, 1
        %vm614 = vcmask 1047559
        %v615 = vsel %vm614, %v613, %v612
        %vm617 = vcmask 64512
        %618 = vst.msk [vmem:[%s275] sm:$0xff] %vm617, %v615
        %619 = vrot.lane.b32.xlu0 %v615, 120
        %v620 = vpop.permute.xlu0 %619
        %s622 = scalar_lea.vmem %s275, 8 [#allocation7]
        %623 = vst.msk [vmem:[%s622] sm:$0xff] %vm617, %v620
        %624 = vrot.lane.b32.xlu0 %v615, 112
        %v625 = vpop.permute.xlu0 %624
        %s627 = scalar_lea.vmem %s275, 16 [#allocation7]
        %628 = vst.msk [vmem:[%s627] sm:$0xff] %vm617, %v625
        %629 = vrot.lane.b32.xlu0 %v615, 104
        %v630 = vpop.permute.xlu0 %629
        %s632 = scalar_lea.vmem %s275, 24 [#allocation7]
        %633 = vst.msk [vmem:[%s632] sm:$0xff] %vm617, %v630
        %634 = vrot.lane.b32.xlu0 %v615, 96
        %v635 = vpop.permute.xlu0 %634
        %s637 = scalar_lea.vmem %s275, 32 [#allocation7]
        %638 = vst.msk [vmem:[%s637] sm:$0xff] %vm617, %v635
        %639 = vrot.lane.b32.xlu0 %v615, 88
        %v640 = vpop.permute.xlu0 %639
        %s642 = scalar_lea.vmem %s275, 40 [#allocation7]
        %643 = vst.msk [vmem:[%s642] sm:$0xff] %vm617, %v640
        %644 = vrot.lane.b32.xlu0 %v615, 80
        %v645 = vpop.permute.xlu0 %644
        %s647 = scalar_lea.vmem %s275, 48 [#allocation7]
        %648 = vst.msk [vmem:[%s647] sm:$0xff] %vm617, %v645
        %649 = vrot.lane.b32.xlu0 %v615, 72
        %v650 = vpop.permute.xlu0 %649
        %s652 = scalar_lea.vmem %s275, 56 [#allocation7]
        %653 = vst.msk [vmem:[%s652] sm:$0xff] %vm617, %v650
        %s654 = sand.u32 %s157, 1
        %s655 = scalar_lea.sflag [#allocation4], %s654
        %s656 = sand.u32 %s157, 1
        %s657 = smul.addr %s656, 64
        %s658 = scalar_lea.vmem [#allocation7], %s657
        // Predicated region
        $region49: #{tpu_custom_call.1} parent=39 // pred_check
          %p659 = pneg %p167
        $region50: #{tpu_custom_call.1} parent=39 // pred_check_branch
          %661 = sbr.rel (%p659) target = $region52
        $region51: #{tpu_custom_call.1} parent=39 // pred_region
          %s663 = ssub.s32 1024, 1024
          %664 = vsyncadd %s655, %s663
          %s665 = smul.addr %s27, 8
          %s666 = sadd.s32 %s28, %s665
          %s667 = smul.addr %s666, 128
          %s668 = scalar_lea.hbm %s5, %s667
          %s669 = sshll.u32 %s658, 4
          %s670 = int_to_ptr.vmem [resolvable:$true] %s669
          %675 = dma.vmem_to_hbm [thread:$0]  %s670, 1024, %s668, %s655, 128, 128, 8
        $region52: #{tpu_custom_call.1} parent=39 // pred_fallthru
          _
      $region40: #{tpu_custom_call.1} parent=5 // pred_fallthru
        _
      %p676 = scmp.le.s32.totalorder 2, %s18
      // Predicated region
      $region53: #{tpu_custom_call.1} parent=5 // pred_check
        %p677 = pneg %p676
      $region54: #{tpu_custom_call.1} parent=5 // pred_check_branch
        %679 = sbr.rel (%p677) target = $region56
      $region55: #{tpu_custom_call.1} parent=5 // pred_region
        %s680 = ssub.s32 %s18, 2
        // Predicated region
        $region57: #{tpu_custom_call.1} parent=55 // pred_check
          %p681 = pneg %p173
        $region58: #{tpu_custom_call.1} parent=55 // pred_check_branch
          %683 = sbr.rel (%p681) target = $region60
        $region59: #{tpu_custom_call.1} parent=55 // pred_region
          %s684 = sand.u32 %s158, 1
          %s685 = scalar_lea.sflag [#allocation4], %s684
          %s686 = sand.u32 %s158, 1
          %s687 = smul.addr %s686, 64
          %s688 = scalar_lea.vmem [#allocation7], %s687
          %689 = dma.done %s685, 1024
        $region60: #{tpu_custom_call.1} parent=55 // pred_fallthru
          _
      $region56: #{tpu_custom_call.1} parent=5 // pred_fallthru
        _
    $region6: #{tpu_custom_call.1} parent=1 // loop_footer
      %s22 = sadd.s32 1, %s18
    $region7: #{tpu_custom_call.1} parent=1 // loop_footer_branch
      %17 = sbr.rel target = $region3
    $region8: #{tpu_custom_call.1} parent=1 // loop_exit
      _
    %690 = vsyncpa [#allocation3], 1
    %s691 = scalar_lea.sflag [#allocation3], 1
    %692 = vsyncpa %s691, 1
    %693 = vsyncpa [#allocation6], 1
    %694 = vsyncpa [#allocation4], 1
    %s695 = scalar_lea.sflag [#allocation4], 1
    %696 = vsyncpa %s695, 1

</llo_original>
